<compile_context>
chip_gen: v6e
topology: v6e:2x2x1
jax: 0.10.0
libtpu: 0.0.40
codegen_flags: <defaults>
</compile_context>

<pallas_src>
import functools

import jax
import jax.numpy as jnp
from jax import lax
from jax.experimental import pallas as pl
from jax.experimental.pallas import tpu as pltpu


# ----------------------------------------------------------------------------
# Pallas kernel: two im2col matmuls + GRU elementwise combine
# ----------------------------------------------------------------------------
def _gru_kernel(xh_ref, wg_ref, woh_ref, b_ref, o_ref, *, H, W, K, CI, CH):
    P = K // 2
    Wp = W + 2 * P                 # padded width
    Nv = H * Wp                    # "wide" output positions (pad cols cut later)
    CT = CI + CH
    Next = xh_ref.shape[1]
    c = P * (Wp + 1)               # flat offset of the conv center / valid h

    # --- im2col slab for the fused [x||h] gate conv: stack the 9 shifted
    #     views along the contraction (sublane) axis ---------------------------
    taps = []
    for kh in range(K):
        for kw in range(K):
            s = kh * Wp + kw                       # static tap offset (lanes)
            taps.append(xh_ref[:, s:s + Nv])       # (CT, Nv) bf16
    slab_xh = jnp.concatenate(taps, axis=0)        # (K*K*CT, Nv) bf16

    # One wide-contraction bf16 MXU matmul for update | reset | out_x gates.
    acc = jnp.dot(wg_ref[...], slab_xh,
                  preferred_element_type=jnp.float32) + b_ref[...]   # (3CH, Nv) f32

    update = jax.nn.sigmoid(acc[0:CH, :])          # sublane-aligned gate slices
    reset = jax.nn.sigmoid(acc[CH:2 * CH, :])
    out_x = acc[2 * CH:3 * CH, :]

    # Hidden state aligned with the wide output grid (zero at pad columns).
    h_center = xh_ref[CI:CT, c:c + Nv].astype(jnp.float32)           # (CH, Nv)
    hr = (h_center * reset).astype(jnp.bfloat16)                     # prev_state*reset

    # Zero-extend h*reset back to the padded flat layout; the borders are
    # compile-time zeros (no full-buffer scratch zeroing per grid step).
    hr_ext = jnp.concatenate(
        [jnp.zeros((CH, c), jnp.bfloat16), hr,
         jnp.zeros((CH, Next - c - Nv), jnp.bfloat16)], axis=1)      # (CH, Next)

    # --- im2col slab + single matmul for the out-gate h*reset conv -----------
    taps_hr = []
    for kh in range(K):
        for kw in range(K):
            s = kh * Wp + kw
            taps_hr.append(hr_ext[:, s:s + Nv])
    slab_hr = jnp.concatenate(taps_hr, axis=0)     # (K*K*CH, Nv) bf16

    out = jnp.tanh(out_x + jnp.dot(woh_ref[...], slab_hr,
                                   preferred_element_type=jnp.float32))

    # --- GRU combine (f32) ----------------------------------------------------
    new_h = h_center * (1.0 - update) + out * update
    o_ref[...] = new_h.astype(o_ref.dtype)


# ----------------------------------------------------------------------------
# Wrapper: layout plumbing + pallas_call
# ----------------------------------------------------------------------------
def spectral_conv_gru_cell(x_nchw, h_nchw, params, kernel_size):
    K = kernel_size
    P = K // 2
    B, CI, H, W = x_nchw.shape
    CH = h_nchw.shape[1]
    CT = CI + CH
    Hp, Wp = H + 2 * P, W + 2 * P
    Nv = H * Wp
    Next = Hp * Wp + 2 * P         # extra +/-P so every tap slice stays in range

    # Fused channels-first flat layout, bf16 for the MXU and to halve HBM traffic.
    xh = jnp.concatenate([x_nchw, h_nchw], axis=1).astype(jnp.bfloat16)
    xh = jnp.pad(xh, ((0, 0), (0, 0), (P, P), (P, P)))   # spatial zero pad
    xh = xh.reshape(B, CT, Hp * Wp)
    xh = jnp.pad(xh, ((0, 0), (0, 0), (P, P)))           # flat guard pad -> (B, CT, Next)

    kern = functools.partial(_gru_kernel, H=H, W=W, K=K, CI=CI, CH=CH)
    out_wide = pl.pallas_call(
        kern,
        out_shape=jax.ShapeDtypeStruct((B, CH, Nv), jnp.float32),
        grid_spec=pltpu.PrefetchScalarGridSpec(
            num_scalar_prefetch=0,
            grid=(B,),
            in_specs=[
                pl.BlockSpec((None, CT, Next), lambda b: (b, 0, 0)),
                pl.BlockSpec((3 * CH, K * K * CT), lambda b: (0, 0)),
                pl.BlockSpec((CH, K * K * CH), lambda b: (0, 0)),
                pl.BlockSpec((3 * CH, 1), lambda b: (0, 0)),
            ],
            out_specs=pl.BlockSpec((None, CH, Nv), lambda b: (b, 0, 0)),
        ),
        # Batch axis parallel: shards across the two TensorCores on v7x,
        # harmless (single TC) on v5e/v6e.  Each step writes its full block
        # and carries no scratch state, so parallel execution is safe.
        compiler_params=pltpu.CompilerParams(
            dimension_semantics=("parallel",)),
    )(xh, params["wg"], params["woh"], params["b"])

    # wide flat (B, CH, H*Wp) -> NCHW (B, CH, H, W): just drop the pad columns.
    return out_wide.reshape(B, CH, H, Wp)[:, :, :, P:P + W]


# ----------------------------------------------------------------------------
# Deterministic parameter construction (orthogonal init + spectral norm, fused
# into the kernel's im2col weight layout)
# ----------------------------------------------------------------------------
def _l2normalize(v, eps=1e-12):
    return v / (jnp.linalg.norm(v) + eps)


def make_params(key, input_size, hidden_size, kernel_size):
    CI, CH, K = input_size, hidden_size, kernel_size
    CT = CI + CH
    ortho = jax.nn.initializers.orthogonal()

    def make_gate(k):
        kw_key, ku_key = jax.random.split(k)
        # torch init.orthogonal_ flattens (O, I, K, K) to (O, I*K*K)
        w_mat = ortho(kw_key, (CH, CT * K * K), jnp.float32)
        # SpectralNorm: one power-iteration estimate of the top singular value
        # (PyTorch refines u across forward calls; here it is a one-shot init).
        u = _l2normalize(jax.random.normal(ku_key, (CH,), jnp.float32))
        v = _l2normalize(w_mat.T @ u)
        u = _l2normalize(w_mat @ v)
        sigma = u @ (w_mat @ v)
        w_oihw = (w_mat / sigma).reshape(CH, CT, K, K)       # OIHW
        # Round once to bf16 so the kernel weights and the f32 reference agree.
        return w_oihw.astype(jnp.bfloat16).astype(jnp.float32)

    kz, kr, ko = jax.random.split(key, 3)
    wz, wr, wo = make_gate(kz), make_gate(kr), make_gate(ko)  # OIHW f32 (bf16-exact)

    def im2col_rows(w_oihw):
        # (O, C, Kh, Kw) -> (O, Kh*Kw*C); column index = (kh*K + kw)*C + c,
        # matching the kernel's slab row ordering.
        return jnp.transpose(w_oihw, (0, 2, 3, 1)).reshape(w_oihw.shape[0], -1)

    # out-gate x-part with an explicit zero block for the h channels (so the
    # out_x contribution rides in the same fused gate matmul).
    wo_x = jnp.concatenate(
        [wo[:, :CI], jnp.zeros((CH, CH, K, K), jnp.float32)], axis=1)

    params = {
        "wg": jnp.concatenate(
            [im2col_rows(wz), im2col_rows(wr), im2col_rows(wo_x)],
            axis=0).astype(jnp.bfloat16),                    # (3CH, K*K*CT)
        "woh": im2col_rows(wo[:, CI:]).astype(jnp.bfloat16),  # (CH, K*K*CH)
        "b": jnp.zeros((3 * CH, 1), jnp.float32),             # init.constant_ 0.0
    }
    hwio = lambda w: jnp.transpose(w, (2, 3, 1, 0))           # for the reference
    return params, (hwio(wz), hwio(wr), hwio(wo))


# ----------------------------------------------------------------------------
# Plain-JAX reference (same math as the PyTorch forward) for verification
# ----------------------------------------------------------------------------
def reference_nchw(x, h, wz, wr, wo):
    dn = ("NCHW", "HWIO", "NCHW")
    conv = lambda a, w: lax.conv_general_dilated(
        a, w, (1, 1), "SAME", dimension_numbers=dn,
        precision=lax.Precision.HIGHEST)
    stacked = jnp.concatenate([x, h], axis=1)
    update = jax.nn.sigmoid(conv(stacked, wz))
    reset = jax.nn.sigmoid(conv(stacked, wr))
    # match the kernel's bf16 rounding of prev_state*reset before the out conv
    hr = (h * reset).astype(jnp.bfloat16).astype(jnp.float32)
    out = jnp.tanh(conv(jnp.concatenate([x, hr], axis=1), wo))
    return h * (1.0 - update) + out * update


if __name__ == "__main__":
    B, CI, H, W = 2, 4, 16, 16   # batch, input channels, spatial
    CH, K = 8, 3                 # hidden channels, conv kernel size

    key = jax.random.PRNGKey(0)
    kx, kh, kp = jax.random.split(key, 3)
    x = jax.random.normal(kx, (B, CI, H, W), jnp.float32)        # NCHW
    h_prev = jax.random.normal(kh, (B, CH, H, W), jnp.float32)   # NCHW
    params, (wz, wr, wo) = make_params(kp, CI, CH, K)

    out = spectral_conv_gru_cell(x, h_prev, params, K)
    out = jax.block_until_ready(out)
    assert out.shape == (B, CH, H, W)

    # Reference with the same bf16 quantization points as the kernel.
    x_q = x.astype(jnp.bfloat16).astype(jnp.float32)
    h_q = h_prev.astype(jnp.bfloat16).astype(jnp.float32)
    ref = reference_nchw(x_q, h_q, wz, wr, wo)

    max_err = float(jnp.max(jnp.abs(out - ref)))
    assert jnp.allclose(out, ref, atol=1e-2, rtol=1e-2), max_err
    print("KERNEL_OK")
</pallas_src>

<mosaic_0001>
module attributes {stable_mosaic.version = 11 : i64} {
  func.func @_gru_kernel(%arg0: i32, %arg1: memref<1x12x326xbf16, #tpu.memory_space<vmem>>, %arg2: memref<24x108xbf16, #tpu.memory_space<vmem>>, %arg3: memref<8x72xbf16, #tpu.memory_space<vmem>>, %arg4: memref<24x1xf32, #tpu.memory_space<vmem>>, %arg5: memref<1x8x288xf32, #tpu.memory_space<vmem>>) attributes {dimension_semantics = [#tpu.dimension_semantics<parallel>], iteration_bounds = array<i64: 2>, scalar_prefetch = 0 : i64, scratch_operands = 0 : i64, tpu.core_type = #tpu.core_type<tc>, window_params = [{transform_indices = @transform_0, window_bounds = array<i64: 1, 12, 326>}, {pipeline_mode = #tpu.pipeline_mode<synchronous>, transform_indices = @transform_1, window_bounds = array<i64: 24, 108>}, {pipeline_mode = #tpu.pipeline_mode<synchronous>, transform_indices = @transform_2, window_bounds = array<i64: 8, 72>}, {pipeline_mode = #tpu.pipeline_mode<synchronous>, transform_indices = @transform_3, window_bounds = array<i64: 24, 1>}, {transform_indices = @transform_4, window_bounds = array<i64: 1, 8, 288>}]} {
    %c0 = arith.constant 0 : index
    %c0_0 = arith.constant 0 : index
    %c0_1 = arith.constant 0 : index
    %0 = vector.load %arg1[%c0, %c0_0, %c0_1] : memref<1x12x326xbf16, #tpu.memory_space<vmem>>, vector<1x12x288xbf16>
    %1 = vector.shape_cast %0 : vector<1x12x288xbf16> to vector<12x288xbf16>
    %c0_2 = arith.constant 0 : index
    %c0_3 = arith.constant 0 : index
    %c1 = arith.constant 1 : index
    %2 = vector.load %arg1[%c0_2, %c0_3, %c1] : memref<1x12x326xbf16, #tpu.memory_space<vmem>>, vector<1x12x288xbf16>
    %3 = vector.shape_cast %2 : vector<1x12x288xbf16> to vector<12x288xbf16>
    %c0_4 = arith.constant 0 : index
    %c0_5 = arith.constant 0 : index
    %c2 = arith.constant 2 : index
    %4 = vector.load %arg1[%c0_4, %c0_5, %c2] : memref<1x12x326xbf16, #tpu.memory_space<vmem>>, vector<1x12x288xbf16>
    %5 = vector.shape_cast %4 : vector<1x12x288xbf16> to vector<12x288xbf16>
    %c0_6 = arith.constant 0 : index
    %c0_7 = arith.constant 0 : index
    %c18 = arith.constant 18 : index
    %6 = vector.load %arg1[%c0_6, %c0_7, %c18] : memref<1x12x326xbf16, #tpu.memory_space<vmem>>, vector<1x12x288xbf16>
    %7 = vector.shape_cast %6 : vector<1x12x288xbf16> to vector<12x288xbf16>
    %c0_8 = arith.constant 0 : index
    %c0_9 = arith.constant 0 : index
    %c19 = arith.constant 19 : index
    %8 = vector.load %arg1[%c0_8, %c0_9, %c19] : memref<1x12x326xbf16, #tpu.memory_space<vmem>>, vector<1x12x288xbf16>
    %9 = vector.shape_cast %8 : vector<1x12x288xbf16> to vector<12x288xbf16>
    %c0_10 = arith.constant 0 : index
    %c0_11 = arith.constant 0 : index
    %c20 = arith.constant 20 : index
    %10 = vector.load %arg1[%c0_10, %c0_11, %c20] : memref<1x12x326xbf16, #tpu.memory_space<vmem>>, vector<1x12x288xbf16>
    %11 = vector.shape_cast %10 : vector<1x12x288xbf16> to vector<12x288xbf16>
    %c0_12 = arith.constant 0 : index
    %c0_13 = arith.constant 0 : index
    %c36 = arith.constant 36 : index
    %12 = vector.load %arg1[%c0_12, %c0_13, %c36] : memref<1x12x326xbf16, #tpu.memory_space<vmem>>, vector<1x12x288xbf16>
    %13 = vector.shape_cast %12 : vector<1x12x288xbf16> to vector<12x288xbf16>
    %c0_14 = arith.constant 0 : index
    %c0_15 = arith.constant 0 : index
    %c37 = arith.constant 37 : index
    %14 = vector.load %arg1[%c0_14, %c0_15, %c37] : memref<1x12x326xbf16, #tpu.memory_space<vmem>>, vector<1x12x288xbf16>
    %15 = vector.shape_cast %14 : vector<1x12x288xbf16> to vector<12x288xbf16>
    %c0_16 = arith.constant 0 : index
    %c0_17 = arith.constant 0 : index
    %c38 = arith.constant 38 : index
    %16 = vector.load %arg1[%c0_16, %c0_17, %c38] : memref<1x12x326xbf16, #tpu.memory_space<vmem>>, vector<1x12x288xbf16>
    %17 = vector.shape_cast %16 : vector<1x12x288xbf16> to vector<12x288xbf16>
    %18 = tpu.concatenate %1, %3, %5, %7, %9, %11, %13, %15, %17 in 0 : vector<12x288xbf16>, vector<12x288xbf16>, vector<12x288xbf16>, vector<12x288xbf16>, vector<12x288xbf16>, vector<12x288xbf16>, vector<12x288xbf16>, vector<12x288xbf16>, vector<12x288xbf16> -> vector<108x288xbf16>
    %c0_18 = arith.constant 0 : index
    %c0_19 = arith.constant 0 : index
    %19 = vector.load %arg2[%c0_18, %c0_19] : memref<24x108xbf16, #tpu.memory_space<vmem>>, vector<24x108xbf16>
    %cst = arith.constant dense<0.000000e+00> : vector<24x288xf32>
    %20 = tpu.matmul %19, %18, %cst {dimension_numbers = #tpu.dot_dimension_numbers<[1], [0], [0], [1], [0, 0, 1, 1], [], []>} : vector<24x108xbf16>, vector<108x288xbf16>, vector<24x288xf32> -> vector<24x288xf32>
    %c0_20 = arith.constant 0 : index
    %c0_21 = arith.constant 0 : index
    %21 = vector.load %arg4[%c0_20, %c0_21] : memref<24x1xf32, #tpu.memory_space<vmem>>, vector<24x1xf32>
    %22 = vector.broadcast %21 : vector<24x1xf32> to vector<24x288xf32>
    %23 = arith.addf %20, %22 : vector<24x288xf32>
    %24 = vector.extract_strided_slice %23 {offsets = [0, 0], sizes = [8, 288], strides = [1, 1]} : vector<24x288xf32> to vector<8x288xf32>
    %25 = arith.negf %24 : vector<8x288xf32>
    %26 = math.exp %25 : vector<8x288xf32>
    %cst_22 = arith.constant 1.000000e+00 : f32
    %27 = vector.broadcast %cst_22 : f32 to vector<8x288xf32>
    %28 = arith.addf %27, %26 : vector<8x288xf32>
    %29 = arith.divf %27, %28 : vector<8x288xf32>
    %30 = vector.extract_strided_slice %23 {offsets = [8, 0], sizes = [8, 288], strides = [1, 1]} : vector<24x288xf32> to vector<8x288xf32>
    %31 = arith.negf %30 : vector<8x288xf32>
    %32 = math.exp %31 : vector<8x288xf32>
    %cst_23 = arith.constant 1.000000e+00 : f32
    %33 = vector.broadcast %cst_23 : f32 to vector<8x288xf32>
    %34 = arith.addf %33, %32 : vector<8x288xf32>
    %35 = arith.divf %33, %34 : vector<8x288xf32>
    %36 = vector.extract_strided_slice %23 {offsets = [16, 0], sizes = [8, 288], strides = [1, 1]} : vector<24x288xf32> to vector<8x288xf32>
    %c0_24 = arith.constant 0 : index
    %c4 = arith.constant 4 : index
    %c19_25 = arith.constant 19 : index
    %37 = vector.load %arg1[%c0_24, %c4, %c19_25] : memref<1x12x326xbf16, #tpu.memory_space<vmem>>, vector<1x8x288xbf16>
    %38 = vector.shape_cast %37 : vector<1x8x288xbf16> to vector<8x288xbf16>
    %39 = arith.extf %38 : vector<8x288xbf16> to vector<8x288xf32>
    %40 = arith.mulf %39, %35 : vector<8x288xf32>
    %41 = arith.truncf %40 : vector<8x288xf32> to vector<8x288xbf16>
    %cst_26 = arith.constant 0.000000e+00 : bf16
    %42 = vector.broadcast %cst_26 : bf16 to vector<8x19xbf16>
    %cst_27 = arith.constant 0.000000e+00 : bf16
    %43 = vector.broadcast %cst_27 : bf16 to vector<8x19xbf16>
    %44 = tpu.concatenate %42, %41, %43 in 1 : vector<8x19xbf16>, vector<8x288xbf16>, vector<8x19xbf16> -> vector<8x326xbf16>
    %45 = vector.extract_strided_slice %44 {offsets = [0, 0], sizes = [8, 288], strides = [1, 1]} : vector<8x326xbf16> to vector<8x288xbf16>
    %46 = vector.extract_strided_slice %44 {offsets = [0, 1], sizes = [8, 288], strides = [1, 1]} : vector<8x326xbf16> to vector<8x288xbf16>
    %47 = vector.extract_strided_slice %44 {offsets = [0, 2], sizes = [8, 288], strides = [1, 1]} : vector<8x326xbf16> to vector<8x288xbf16>
    %48 = vector.extract_strided_slice %44 {offsets = [0, 18], sizes = [8, 288], strides = [1, 1]} : vector<8x326xbf16> to vector<8x288xbf16>
    %49 = vector.extract_strided_slice %44 {offsets = [0, 19], sizes = [8, 288], strides = [1, 1]} : vector<8x326xbf16> to vector<8x288xbf16>
    %50 = vector.extract_strided_slice %44 {offsets = [0, 20], sizes = [8, 288], strides = [1, 1]} : vector<8x326xbf16> to vector<8x288xbf16>
    %51 = vector.extract_strided_slice %44 {offsets = [0, 36], sizes = [8, 288], strides = [1, 1]} : vector<8x326xbf16> to vector<8x288xbf16>
    %52 = vector.extract_strided_slice %44 {offsets = [0, 37], sizes = [8, 288], strides = [1, 1]} : vector<8x326xbf16> to vector<8x288xbf16>
    %53 = vector.extract_strided_slice %44 {offsets = [0, 38], sizes = [8, 288], strides = [1, 1]} : vector<8x326xbf16> to vector<8x288xbf16>
    %54 = tpu.concatenate %45, %46, %47, %48, %49, %50, %51, %52, %53 in 0 : vector<8x288xbf16>, vector<8x288xbf16>, vector<8x288xbf16>, vector<8x288xbf16>, vector<8x288xbf16>, vector<8x288xbf16>, vector<8x288xbf16>, vector<8x288xbf16>, vector<8x288xbf16> -> vector<72x288xbf16>
    %c0_28 = arith.constant 0 : index
    %c0_29 = arith.constant 0 : index
    %55 = vector.load %arg3[%c0_28, %c0_29] : memref<8x72xbf16, #tpu.memory_space<vmem>>, vector<8x72xbf16>
    %cst_30 = arith.constant dense<0.000000e+00> : vector<8x288xf32>
    %56 = tpu.matmul %55, %54, %cst_30 {dimension_numbers = #tpu.dot_dimension_numbers<[1], [0], [0], [1], [0, 0, 1, 1], [], []>} : vector<8x72xbf16>, vector<72x288xbf16>, vector<8x288xf32> -> vector<8x288xf32>
    %57 = arith.addf %36, %56 : vector<8x288xf32>
    %58 = math.tanh %57 : vector<8x288xf32>
    %cst_31 = arith.constant 1.000000e+00 : f32
    %59 = vector.broadcast %cst_31 : f32 to vector<8x288xf32>
    %60 = arith.subf %59, %29 : vector<8x288xf32>
    %61 = arith.mulf %39, %60 : vector<8x288xf32>
    %62 = arith.mulf %58, %29 : vector<8x288xf32>
    %63 = arith.addf %61, %62 : vector<8x288xf32>
    %c0_32 = arith.constant 0 : index
    %c0_33 = arith.constant 0 : index
    %c0_34 = arith.constant 0 : index
    %64 = vector.load %arg5[%c0_32, %c0_33, %c0_34] : memref<1x8x288xf32, #tpu.memory_space<vmem>>, vector<1x8x288xf32>
    %65 = vector.shape_cast %64 : vector<1x8x288xf32> to vector<8x288xf32>
    %66 = vector.shape_cast %63 : vector<8x288xf32> to vector<1x8x288xf32>
    tpu.vector_store %arg5[%c0_32, %c0_33, %c0_34], %66 {strides = array<i32>} : memref<1x8x288xf32, #tpu.memory_space<vmem>>, vector<1x8x288xf32>,
    return
  }
  func.func @transform_0(%arg0: i32) -> (i32, i32, i32) {
    %c0_i32 = arith.constant 0 : i32
    %c0_i32_0 = arith.constant 0 : i32
    %c0_i32_1 = arith.constant 0 : i32
    return %arg0, %c0_i32, %c0_i32_0 : i32, i32, i32
  }
  func.func @transform_1(%arg0: i32) -> (i32, i32) {
    %c0_i32 = arith.constant 0 : i32
    %c0_i32_0 = arith.constant 0 : i32
    %c0_i32_1 = arith.constant 0 : i32
    return %c0_i32, %c0_i32_0 : i32, i32
  }
  func.func @transform_2(%arg0: i32) -> (i32, i32) {
    %c0_i32 = arith.constant 0 : i32
    %c0_i32_0 = arith.constant 0 : i32
    %c0_i32_1 = arith.constant 0 : i32
    return %c0_i32, %c0_i32_0 : i32, i32
  }
  func.func @transform_3(%arg0: i32) -> (i32, i32) {
    %c0_i32 = arith.constant 0 : i32
    %c0_i32_0 = arith.constant 0 : i32
    %c0_i32_1 = arith.constant 0 : i32
    return %c0_i32, %c0_i32_0 : i32, i32
  }
  func.func @transform_4(%arg0: i32) -> (i32, i32, i32) {
    %c0_i32 = arith.constant 0 : i32
    %c0_i32_0 = arith.constant 0 : i32
    %c0_i32_1 = arith.constant 0 : i32
    return %arg0, %c0_i32, %c0_i32_0 : i32, i32, i32
  }
}

</mosaic_0001>

<llo_original>
// kernel: tpu_custom_call.1
$region0: #{tpu_custom_call.1}
  #allocation0 [shape = 'u32[]', space=smem, size = 0x4, offset = 0x4, fixed_abs, tag = 'smem constant byte address 0x4 - core index']
  #allocation1 [shape = 'u32[144,128]{1,0:T(1,128)}', space=vmem, size = 0x12000, scoped, tag = 'internal scratch']
  %s0 = inlined_call_operand.vmem [shape: bf16[2,12,326], index: 0, kind: input, shape index: {}]
  %s1 = inlined_call_operand.vmem [shape: bf16[24,108], index: 1, kind: input, shape index: {}]
  %s2 = inlined_call_operand.vmem [shape: bf16[8,72], index: 2, kind: input, shape index: {}]
  %s3 = inlined_call_operand.vmem [shape: f32[24,1], index: 3, kind: input, shape index: {}]
  %s4 = inlined_call_operand.hbm [shape: f32[2,8,288], index: 4, kind: output, shape index: {}]
  %s5 = sld [smem:[#allocation0]]
  $region49: #{tpu_custom_call.1} parent=0
    _
  %s7 = ssub.s32 1, %s5
  %s8 = scalar_select 0, %s7, %s5
  $region1: #{tpu_custom_call.1} parent=0
    #allocation2 [shape = 'u8[24576]{0}', space=vmem, size = 0x6000, scoped, tag = 'output window, operand 0']
    #allocation3 [shape = 's32[2]{0}', space=sflag, size = 0x8, scoped, tag = 'scoped memory for tpu_custom_call.1']
    %9 = vsyncpa [#allocation3], 0
    %s10 = scalar_lea.sflag [#allocation3], 1
    %11 = vsyncpa %s10, 0
    loop: start=0, step=1, limit=4
    $region2: #{tpu_custom_call.1} parent=1 // loop_pre_header
      _
    $region3: #{tpu_custom_call.1} parent=1 // loop_header
      %s13 = sphi 0, %s17
      %p14 = scmp.ge.s32.totalorder %s13, 4
      %s23 = sphi 0, %s25
      %s26 = sphi 0, %s23
      %s27 = sphi 0, %s26
      %s43 = sphi 0, %s27
      %s47 = sphi 0, %s47
      %s49 = sphi 0, %s47
      %s50 = sphi 0, %s49
      %s64 = sphi 0, %s50
      %s68 = sphi 0, %s68
      %s70 = sphi 0, %s68
      %s71 = sphi 0, %s70
      %s85 = sphi 0, %s71
      %s89 = sphi 0, %s89
      %s91 = sphi 0, %s89
      %s92 = sphi 0, %s91
      %s106 = sphi 0, %s92
      %s112 = sphi 0, %s114
      %s115 = sphi 0, %s112
      %s116 = sphi 0, %s115
      %s132 = sphi 0, %s116
    $region4: #{tpu_custom_call.1} parent=1 // loop_header_branch
      %16 = sbr.rel (%p14) target = $region8
    $region5: #{tpu_custom_call.1} parent=1 // loop_body
      %s18 = ssub.s32 %s13, 1
      %s19 = ssub.s32 %s13, 2
      %s20 = sadd.s32 %s13, 1
      %s21 = ssub.s32 %s13, %s20
      %p22 = scmp.eq.s32.totalorder %s21, 0
      %s24 = sadd.s32 %s23, 1
      %s25 = scalar_select %p22, %s23, %s24
      %p28 = pneg %p22
      %p29 = scmp.eq.s32.totalorder %s13, 1
      %p30 = por %p28, %p29
      %p31 = scmp.ne.s32.totalorder %s23, %s26
      %p32 = scmp.eq.s32.totalorder %s13, 0
      %p33 = por %p31, %p32
      %p34 = scmp.ne.s32.totalorder %s23, %s26
      %p35 = scmp.eq.s32.totalorder %s18, 1
      %p36 = por %p34, %p35
      %p37 = scmp.ne.s32.totalorder %s26, %s27
      %p38 = scmp.eq.s32.totalorder %s18, 0
      %p39 = por %p37, %p38
      %p40 = scmp.ne.s32.totalorder %s26, %s27
      %p41 = scmp.eq.s32.totalorder %s19, 1
      %p42 = por %p40, %p41
      %p44 = scmp.ne.s32.totalorder %s27, %s43
      %p45 = scmp.eq.s32.totalorder %s19, 0
      %p46 = por %p44, %p45
      %s48 = sadd.s32 %s47, 1
      %p51 = scmp.eq.s32.totalorder %s13, 1
      %p52 = scmp.ne.s32.totalorder %s47, %s49
      %p53 = scmp.eq.s32.totalorder %s13, 0
      %p54 = por %p52, %p53
      %p55 = scmp.ne.s32.totalorder %s47, %s49
      %p56 = scmp.eq.s32.totalorder %s18, 1
      %p57 = por %p55, %p56
      %p58 = scmp.ne.s32.totalorder %s49, %s50
      %p59 = scmp.eq.s32.totalorder %s18, 0
      %p60 = por %p58, %p59
      %p61 = scmp.ne.s32.totalorder %s49, %s50
      %p62 = scmp.eq.s32.totalorder %s19, 1
      %p63 = por %p61, %p62
      %p65 = scmp.ne.s32.totalorder %s50, %s64
      %p66 = scmp.eq.s32.totalorder %s19, 0
      %p67 = por %p65, %p66
      %s69 = sadd.s32 %s68, 1
      %p72 = scmp.eq.s32.totalorder %s13, 1
      %p73 = scmp.ne.s32.totalorder %s68, %s70
      %p74 = scmp.eq.s32.totalorder %s13, 0
      %p75 = por %p73, %p74
      %p76 = scmp.ne.s32.totalorder %s68, %s70
      %p77 = scmp.eq.s32.totalorder %s18, 1
      %p78 = por %p76, %p77
      %p79 = scmp.ne.s32.totalorder %s70, %s71
      %p80 = scmp.eq.s32.totalorder %s18, 0
      %p81 = por %p79, %p80
      %p82 = scmp.ne.s32.totalorder %s70, %s71
      %p83 = scmp.eq.s32.totalorder %s19, 1
      %p84 = por %p82, %p83
      %p86 = scmp.ne.s32.totalorder %s71, %s85
      %p87 = scmp.eq.s32.totalorder %s19, 0
      %p88 = por %p86, %p87
      %s90 = sadd.s32 %s89, 1
      %p93 = scmp.eq.s32.totalorder %s13, 1
      %p94 = scmp.ne.s32.totalorder %s89, %s91
      %p95 = scmp.eq.s32.totalorder %s13, 0
      %p96 = por %p94, %p95
      %p97 = scmp.ne.s32.totalorder %s89, %s91
      %p98 = scmp.eq.s32.totalorder %s18, 1
      %p99 = por %p97, %p98
      %p100 = scmp.ne.s32.totalorder %s91, %s92
      %p101 = scmp.eq.s32.totalorder %s18, 0
      %p102 = por %p100, %p101
      %p103 = scmp.ne.s32.totalorder %s91, %s92
      %p104 = scmp.eq.s32.totalorder %s19, 1
      %p105 = por %p103, %p104
      %p107 = scmp.ne.s32.totalorder %s92, %s106
      %p108 = scmp.eq.s32.totalorder %s19, 0
      %p109 = por %p107, %p108
      %s110 = ssub.s32 %s13, %s20
      %p111 = scmp.eq.s32.totalorder %s110, 0
      %s113 = sadd.s32 %s112, 1
      %s114 = scalar_select %p111, %s112, %s113
      %p117 = pneg %p111
      %p118 = scmp.eq.s32.totalorder %s13, 1
      %p119 = por %p117, %p118
      %p120 = scmp.ne.s32.totalorder %s112, %s115
      %p121 = scmp.eq.s32.totalorder %s13, 0
      %p122 = por %p120, %p121
      %p123 = scmp.ne.s32.totalorder %s112, %s115
      %p124 = scmp.eq.s32.totalorder %s18, 1
      %p125 = por %p123, %p124
      %p126 = scmp.ne.s32.totalorder %s115, %s116
      %p127 = scmp.eq.s32.totalorder %s18, 0
      %p128 = por %p126, %p127
      %p129 = scmp.ne.s32.totalorder %s115, %s116
      %p130 = scmp.eq.s32.totalorder %s19, 1
      %p131 = por %p129, %p130
      %p133 = scmp.ne.s32.totalorder %s116, %s132
      %p134 = scmp.eq.s32.totalorder %s19, 0
      %p135 = por %p133, %p134
      %p136 = scmp.le.s32.totalorder 1, %s13
      %p137 = scmp.lt.s32.totalorder %s13, 3
      %p138 = pnand %p136, %p137
      %p139 = pneg %p138
      // Predicated region
      $region9: #{tpu_custom_call.1} parent=5 // pred_check
        _
      $region10: #{tpu_custom_call.1} parent=5 // pred_check_branch
        %141 = sbr.rel (%p138) target = $region12
      $region11: #{tpu_custom_call.1} parent=5 // pred_region
        %s142 = ssub.s32 %s13, 1
        // Predicated region
        $region13: #{tpu_custom_call.1} parent=11 // pred_check
          %p143 = pneg %p60
        $region14: #{tpu_custom_call.1} parent=11 // pred_check_branch
          %145 = sbr.rel (%p143) target = $region16
        $region15: #{tpu_custom_call.1} parent=11 // pred_region
          _
        $region16: #{tpu_custom_call.1} parent=11 // pred_fallthru
          _
        // Predicated region
        $region17: #{tpu_custom_call.1} parent=11 // pred_check
          %p146 = pneg %p81
        $region18: #{tpu_custom_call.1} parent=11 // pred_check_branch
          %148 = sbr.rel (%p146) target = $region20
        $region19: #{tpu_custom_call.1} parent=11 // pred_region
          _
        $region20: #{tpu_custom_call.1} parent=11 // pred_fallthru
          _
        // Predicated region
        $region21: #{tpu_custom_call.1} parent=11 // pred_check
          %p149 = pneg %p102
        $region22: #{tpu_custom_call.1} parent=11 // pred_check_branch
          %151 = sbr.rel (%p149) target = $region24
        $region23: #{tpu_custom_call.1} parent=11 // pred_region
          _
        $region24: #{tpu_custom_call.1} parent=11 // pred_fallthru
          _
      $region12: #{tpu_custom_call.1} parent=5 // pred_fallthru
        _
      %p152 = scmp.lt.s32.totalorder %s13, 2
      // Predicated region
      $region25: #{tpu_custom_call.1} parent=5 // pred_check
        %p153 = pneg %p152
      $region26: #{tpu_custom_call.1} parent=5 // pred_check_branch
        %155 = sbr.rel (%p153) target = $region28
      $region27: #{tpu_custom_call.1} parent=5 // pred_region
        // Predicated region
        $region29: #{tpu_custom_call.1} parent=27 // pred_check
          %p156 = pneg %p33
        $region30: #{tpu_custom_call.1} parent=27 // pred_check_branch
          %158 = sbr.rel (%p156) target = $region32
        $region31: #{tpu_custom_call.1} parent=27 // pred_region
          %p159 = scmp.lt.s32.totalorder %s13, 1
          %s160 = scalar_select %p159, %s13, 1
          %s161 = smul.addr %s160, 6
          %s162 = smul.addr %s161, 4
          %s163 = scalar_lea.vmem %s0, %s162
        $region32: #{tpu_custom_call.1} parent=27 // pred_fallthru
          _
      $region28: #{tpu_custom_call.1} parent=5 // pred_fallthru
        _
      %p164 = scmp.le.s32.totalorder 1, %s13
      %p165 = scmp.lt.s32.totalorder %s13, 3
      %p166 = pnand %p164, %p165
      %p167 = pneg %p166
      // Predicated region
      $region33: #{tpu_custom_call.1} parent=5 // pred_check
        _
      $region34: #{tpu_custom_call.1} parent=5 // pred_check_branch
        %169 = sbr.rel (%p166) target = $region36
      $region35: #{tpu_custom_call.1} parent=5 // pred_region
        %s170 = ssub.s32 %s13, 1
        %p171 = scmp.lt.s32.totalorder %s18, 1
        %s172 = scalar_select %p171, %s18, 1
        %s173 = smul.addr %s172, 6
        %s174 = smul.addr %s173, 4
        %s175 = scalar_lea.vmem %s0, %s174
        %p176 = pneg %p39
        %p177 = pneg %p36
        %p178 = pneg %p60
        %p179 = pneg %p57
        %p180 = pneg %p81
        %p181 = pneg %p78
        %p182 = pneg %p102
        %p183 = pneg %p99
        %p184 = pneg %p128
        %p185 = pneg %p125
        %s186 = sand.u32 %s115, 1
        %s187 = scalar_lea.sflag [#allocation3], %s186
        %s188 = sand.u32 %s115, 1
        %s189 = smul.addr %s188, 24
        %s190 = scalar_lea.vmem [#allocation2], %s189
        %p191 = scmp.lt.s32.totalorder %s18, 1
        %s192 = scalar_select %p191, %s18, 1
        %s193 = smul.addr %s192, 6
        %s194 = smul.addr %s193, 4
        %s195 = scalar_lea.vmem %s0, %s194
        %v197 = vld [vmem:[%s195] sm:$0xff]
        %v198 = vld [vmem:[%s195 + $0x8] sm:$0xf]
        %v199 = vld [vmem:[%s195 + $0xc] sm:$0x33]
        %v200 = vld [vmem:[%s195 + $0x14] sm:$0x3]
        %v205 = vunpack.c.l.b16 %v197
        %v206 = vunpack.c.h.b16 %v197
        %v207 = vunpack.c.l.b16 %v198
        %v208 = vunpack.c.l.b16 %v199
        %v209 = vunpack.c.h.b16 %v199
        %v210 = vunpack.c.l.b16 %v200
        %v211 = vpack.c.b16 %v208, %v205
        %v212 = vpack.c.b16 %v209, %v206
        %v213 = vpack.c.b16 %v210, %v207
        %v214 = vrot.slane %v211, 2
        %v215 = vrot.slane %v212, 2
        %v216 = vrot.slane %v213, 2
        %217 = vrot.lane.b32.xlu0 %v214, 127
        %v218 = vpop.permute.xlu0 %217
        %219 = vrot.lane.b32.xlu0 %v215, 127
        %v220 = vpop.permute.xlu0 %219
        %221 = vrot.lane.b32.xlu0 %v216, 127
        %v222 = vpop.permute.xlu0 %221
        %vm223 = vcmask 1039360
        %v224 = vsel %vm223, %v218, %v220
        %v225 = vsel %vm223, %v220, %v222
        %v226 = vpack.c.b16 %v205, %v205
        %v227 = vpack.c.b16 %v206, %v206
        %v228 = vpack.c.b16 %v207, %v207
        %v229 = vpack.c.b16 %v208, %v208
        %v230 = vpack.c.b16 %v209, %v209
        %v231 = vpack.c.b16 %v210, %v210
        %232 = vrot.lane.b32.xlu0 %v226, 126
        %v233 = vpop.permute.xlu0 %232
        %234 = vrot.lane.b32.xlu0 %v227, 126
        %v235 = vpop.permute.xlu0 %234
        %236 = vrot.lane.b32.xlu0 %v228, 126
        %v237 = vpop.permute.xlu0 %236
        %238 = vrot.lane.b32.xlu0 %v229, 126
        %v239 = vpop.permute.xlu0 %238
        %240 = vrot.lane.b32.xlu0 %v230, 126
        %v241 = vpop.permute.xlu0 %240
        %242 = vrot.lane.b32.xlu0 %v231, 126
        %v243 = vpop.permute.xlu0 %242
        %vm244 = vcmask 1031168
        %v245 = vsel %vm244, %v233, %v235
        %v246 = vsel %vm244, %v235, %v237
        %v247 = vsel %vm244, %v239, %v241
        %v248 = vsel %vm244, %v241, %v243
        %v249 = vrot.slane %v211, 6
        %v250 = vrot.slane %v212, 6
        %v251 = vrot.slane %v213, 6
        %252 = vrot.lane.b32.xlu0 %v249, 110
        %v253 = vpop.permute.xlu0 %252
        %254 = vrot.lane.b32.xlu0 %v250, 110
        %v255 = vpop.permute.xlu0 %254
        %256 = vrot.lane.b32.xlu0 %v251, 110
        %v257 = vpop.permute.xlu0 %256
        %vm258 = vcmask 900096
        %v259 = vsel %vm258, %v253, %v255
        %v260 = vsel %vm258, %v255, %v257
        %261 = vrot.lane.b32.xlu0 %v211, 109
        %v262 = vpop.permute.xlu0 %261
        %263 = vrot.lane.b32.xlu0 %v212, 109
        %v264 = vpop.permute.xlu0 %263
        %265 = vrot.lane.b32.xlu0 %v213, 109
        %v266 = vpop.permute.xlu0 %265
        %vm267 = vcmask 891904
        %v268 = vsel %vm267, %v262, %v264
        %v269 = vsel %vm267, %v264, %v266
        %270 = vrot.lane.b32.xlu0 %v214, 108
        %v271 = vpop.permute.xlu0 %270
        %272 = vrot.lane.b32.xlu0 %v215, 108
        %v273 = vpop.permute.xlu0 %272
        %274 = vrot.lane.b32.xlu0 %v216, 108
        %v275 = vpop.permute.xlu0 %274
        %vm276 = vcmask 883712
        %v277 = vsel %vm276, %v271, %v273
        %v278 = vsel %vm276, %v273, %v275
        %279 = vrot.lane.b32.xlu0 %v226, 92
        %v280 = vpop.permute.xlu0 %279
        %281 = vrot.lane.b32.xlu0 %v227, 92
        %v282 = vpop.permute.xlu0 %281
        %283 = vrot.lane.b32.xlu0 %v228, 92
        %v284 = vpop.permute.xlu0 %283
        %285 = vrot.lane.b32.xlu0 %v229, 92
        %v286 = vpop.permute.xlu0 %285
        %287 = vrot.lane.b32.xlu0 %v230, 92
        %v288 = vpop.permute.xlu0 %287
        %289 = vrot.lane.b32.xlu0 %v231, 92
        %v290 = vpop.permute.xlu0 %289
        %vm291 = vcmask 752640
        %v292 = vsel %vm291, %v280, %v282
        %v293 = vsel %vm291, %v282, %v284
        %v294 = vsel %vm291, %v286, %v288
        %v295 = vsel %vm291, %v288, %v290
        %296 = vrot.lane.b32.xlu0 %v249, 91
        %v297 = vpop.permute.xlu0 %296
        %298 = vrot.lane.b32.xlu0 %v250, 91
        %v299 = vpop.permute.xlu0 %298
        %300 = vrot.lane.b32.xlu0 %v251, 91
        %v301 = vpop.permute.xlu0 %300
        %vm302 = vcmask 744448
        %v303 = vsel %vm302, %v297, %v299
        %v304 = vsel %vm302, %v299, %v301
        %305 = vrot.lane.b32.xlu0 %v211, 90
        %v306 = vpop.permute.xlu0 %305
        %307 = vrot.lane.b32.xlu0 %v212, 90
        %v308 = vpop.permute.xlu0 %307
        %309 = vrot.lane.b32.xlu0 %v213, 90
        %v310 = vpop.permute.xlu0 %309
        %vm311 = vcmask 736256
        %v312 = vsel %vm311, %v306, %v308
        %v313 = vsel %vm311, %v308, %v310
        %vm314 = vcmask 1045504
        %v317 = vsel %vm314, %v211, %v224
        %v321 = vsel %vm314, %v212, %v225
        %v325 = vsel %vm314, %v213, %v222
        %vm327 = vcmask 1043456
        %v329 = vsel %vm327, %v224, %v245
        %v332 = vsel %vm327, %v225, %v246
        %v335 = vsel %vm327, %v222, %v237
        %vm337 = vcmask 1041408
        %v340 = vsel %vm337, %v247, %v259
        %v344 = vsel %vm337, %v248, %v260
        %v348 = vsel %vm337, %v243, %v257
        %v352 = vsel %vm314, %v268, %v277
        %v356 = vsel %vm314, %v269, %v278
        %v360 = vsel %vm314, %v266, %v275
        %v363 = vsel %vm327, %v277, %v292
        %v366 = vsel %vm327, %v278, %v293
        %v369 = vsel %vm327, %v275, %v284
        %v373 = vsel %vm337, %v294, %v303
        %v377 = vsel %vm337, %v295, %v304
        %v381 = vsel %vm337, %v290, %v301
        %v383 = vld [vmem:[%s1] sm:$0xf]
        %v384 = vld [vmem:[%s1 + $0x4] sm:$0xf]
        %v385 = vld [vmem:[%s1 + $0x8] sm:$0xf]
        %v386 = vld [vmem:[%s3] sm:$0xff]
        %v387 = vld [vmem:[%s3 + $0x8] sm:$0xff]
        %v388 = vld [vmem:[%s3 + $0x10] sm:$0xff]
        %390 = vset.pattern.permute.xlu0 0
        %391 = vperm.xlu0 %390, %v386
        %v392 = vpop.permute.xlu0 %391
        %395 = vset.pattern.permute.xlu0 0
        %396 = vperm.xlu0 %395, %v387
        %v397 = vpop.permute.xlu0 %396
        %400 = vset.pattern.permute.xlu0 0
        %401 = vperm.xlu0 %400, %v388
        %v402 = vpop.permute.xlu0 %401
        %v407 = vunpack.c.l.b16 %v383
        %v408 = vunpack.c.l.b16 %v384
        %v409 = vunpack.c.l.b16 %v385
        %v410 = vpack.c.b16 %v408, %v407
        %v411 = vpack.c.b16 %v409, %v409
        %vm412 = vcmask 883712
        %v414 = vsel %vm412, %v410, 0
        %v417 = vsel %vm412, %v411, 0
        %v420 = vsel %vm314, %v312, 0
        %v423 = vsel %vm314, %v313, 0
        %v426 = vsel %vm314, %v310, 0
        %428 = vmatprep.subr.bf16.mxu0 0
        %429 = vmatpush1.bf16.msra.mxu0 0
        %430 = vmatprep.subr.bf16.mxu0 %v423
        %431 = vmatpush1.bf16.msra.mxu0 %v420
        %432 = vmatprep.subr.bf16.mxu0 %v377
        %433 = vmatpush1.bf16.msra.mxu0 %v373
        %434 = vmatprep.subr.bf16.mxu0 %v366
        %435 = vmatpush1.bf16.msra.mxu0 %v363
        %436 = vmatprep.subr.bf16.mxu0 %v356
        %437 = vmatpush1.bf16.msra.mxu0 %v352
        %438 = vmatprep.subr.bf16.mxu0 %v344
        %439 = vmatpush1.bf16.msra.mxu0 %v340
        %440 = vmatprep.subr.bf16.mxu0 %v332
        %441 = vmatpush1.bf16.msra.mxu0 %v329
        %442 = vmatprep.subr.bf16.mxu0 %v321
        %443 = vmatpush1.bf16.msra.mxu0 %v317
        %444 = vmatprep.subr.bf16.mxu0 0
        %445 = vmatpush2.bf16.msra.mxu0 0
        %446 = vmatprep.subr.bf16.mxu0 0
        %447 = vmatpush2.bf16.msra.mxu0 0
        %448 = vmatprep.subr.bf16.mxu0 0
        %449 = vmatpush2.bf16.msra.mxu0 0
        %450 = vmatprep.subr.bf16.mxu0 0
        %451 = vmatpush2.bf16.msra.mxu0 0
        %452 = vmatprep.subr.bf16.mxu0 0
        %453 = vmatpush2.bf16.msra.mxu0 0
        %454 = vmatprep.subr.bf16.mxu0 0
        %455 = vmatpush2.bf16.msra.mxu0 0
        %456 = vmatprep.subr.bf16.mxu0 0
        %457 = vmatpush2.bf16.msra.mxu0 0
        %458 = vmatprep.subr.bf16.mxu0 0
        %459 = vmatpush2.bf16.msra.mxu0 0
        %460 = vmatprep.mubr.bf16.mxu0 0
        %461 = vmatmul.mubr.bf16.gmra.mxu0 %v414
        %v462 = vpop.f32.mrf.mxu0
        %v463 = vadd.f32 %v392, %v462
        %v464 = vpop.f32.mrf.mxu0
        %v465 = vadd.f32 %v392, %v464
        %v466 = vpop.f32.mrf.mxu0
        %v467 = vadd.f32 %v397, %v466
        %v468 = vpop.f32.mrf.mxu0
        %v469 = vadd.f32 %v397, %v468
        %470 = vmatprep.mubr.bf16.mxu0 0
        %471 = vmatmul.mubr.bf16.gmra.mxu0 %v417
        %v472 = vpop.f32.mrf.mxu0
        %v473 = vadd.f32 %v402, %v472
        %v474 = vpop.f32.mrf.mxu0
        %v475 = vadd.f32 %v402, %v474
        %v476 = vpop.f32.mrf.mxu0
        %v477 = vpop.f32.mrf.mxu0
        %478 = vdwg.mxu0
        %479 = vmatprep.subr.bf16.mxu0 0
        %480 = vmatpush1.bf16.msra.mxu0 0
        %481 = vmatprep.subr.bf16.mxu0 0
        %482 = vmatpush1.bf16.msra.mxu0 %v426
        %483 = vmatprep.subr.bf16.mxu0 0
        %484 = vmatpush1.bf16.msra.mxu0 %v381
        %485 = vmatprep.subr.bf16.mxu0 0
        %486 = vmatpush1.bf16.msra.mxu0 %v369
        %487 = vmatprep.subr.bf16.mxu0 0
        %488 = vmatpush1.bf16.msra.mxu0 %v360
        %489 = vmatprep.subr.bf16.mxu0 0
        %490 = vmatpush1.bf16.msra.mxu0 %v348
        %491 = vmatprep.subr.bf16.mxu0 0
        %492 = vmatpush1.bf16.msra.mxu0 %v335
        %493 = vmatprep.subr.bf16.mxu0 0
        %494 = vmatpush1.bf16.msra.mxu0 %v325
        %495 = vmatprep.subr.bf16.mxu0 0
        %496 = vmatpush2.bf16.msra.mxu0 0
        %497 = vmatprep.subr.bf16.mxu0 0
        %498 = vmatpush2.bf16.msra.mxu0 0
        %499 = vmatprep.subr.bf16.mxu0 0
        %500 = vmatpush2.bf16.msra.mxu0 0
        %501 = vmatprep.subr.bf16.mxu0 0
        %502 = vmatpush2.bf16.msra.mxu0 0
        %503 = vmatprep.subr.bf16.mxu0 0
        %504 = vmatpush2.bf16.msra.mxu0 0
        %505 = vmatprep.subr.bf16.mxu0 0
        %506 = vmatpush2.bf16.msra.mxu0 0
        %507 = vmatprep.subr.bf16.mxu0 0
        %508 = vmatpush2.bf16.msra.mxu0 0
        %509 = vmatprep.subr.bf16.mxu0 0
        %510 = vmatpush2.bf16.msra.mxu0 0
        %511 = vmatprep.mubr.bf16.mxu0 0
        %512 = vmatmul.mubr.bf16.gmra.mxu0 %v414
        %v513 = vpop.f32.mrf.mxu0
        %v514 = vadd.f32 %v392, %v513
        %v515 = vpop.f32.mrf.mxu0
        %v516 = vpop.f32.mrf.mxu0
        %v517 = vadd.f32 %v397, %v516
        %v518 = vpop.f32.mrf.mxu0
        %519 = vmatprep.mubr.bf16.mxu0 0
        %520 = vmatmul.mubr.bf16.gmra.mxu0 %v417
        %v521 = vpop.f32.mrf.mxu0
        %v522 = vadd.f32 %v402, %v521
        %v523 = vpop.f32.mrf.mxu0
        %v524 = vpop.f32.mrf.mxu0
        %v525 = vpop.f32.mrf.mxu0
        %526 = vdwg.mxu0
        %v527 = vxor.u32 %v463, 2147483648
        %v528 = vxor.u32 %v465, 2147483648
        %v529 = vxor.u32 %v514, 2147483648
        %v530 = vmul.f32 %v527, 1.442695
        %v531 = vpow.pop %v530
        %v532 = vmul.f32 %v528, 1.442695
        %v533 = vpow.pop %v532
        %v534 = vmul.f32 %v529, 1.442695
        %v535 = vpow.pop %v534
        %v536 = vadd.f32 %v531, 1.0
        %v537 = vadd.f32 %v533, 1.0
        %v538 = vadd.f32 %v535, 1.0
        %v539 = vrcp.pop %v536
        %v540 = vmul.f32 1.0, %v539
        %v541 = vrcp.pop %v537
        %v542 = vmul.f32 1.0, %v541
        %v543 = vrcp.pop %v538
        %v544 = vmul.f32 1.0, %v543
        %v545 = vxor.u32 %v467, 2147483648
        %v546 = vxor.u32 %v469, 2147483648
        %v547 = vxor.u32 %v517, 2147483648
        %v548 = vmul.f32 %v545, 1.442695
        %v549 = vpow.pop %v548
        %v550 = vmul.f32 %v546, 1.442695
        %v551 = vpow.pop %v550
        %v552 = vmul.f32 %v547, 1.442695
        %v553 = vpow.pop %v552
        %v554 = vadd.f32 %v549, 1.0
        %v555 = vadd.f32 %v551, 1.0
        %v556 = vadd.f32 %v553, 1.0
        %v557 = vrcp.pop %v554
        %v558 = vmul.f32 1.0, %v557
        %v559 = vrcp.pop %v555
        %v560 = vmul.f32 1.0, %v559
        %v561 = vrcp.pop %v556
        %v562 = vmul.f32 1.0, %v561
        %v563 = vld [vmem:[%s195] sm:$0xcc]
        %v564 = vld [vmem:[%s195 + $0x8] sm:$0xc]
        %v565 = vunpack.c.l.bf16 %v563
        %v566 = vunpack.c.h.bf16 %v563
        %v567 = vunpack.c.l.bf16 %v564
        %v568 = vunpack.c.l.bf16 %v199
        %v569 = vunpack.c.h.bf16 %v199
        %v570 = vunpack.c.l.bf16 %v200
        %v574 = vrot.slane %v558, 4
        %v575 = vrot.slane %v560, 4
        %v576 = vrot.slane %v562, 4
        %577 = vrot.lane.b32.xlu0 %v574, 19
        %v578 = vpop.permute.xlu0 %577
        %579 = vrot.lane.b32.xlu0 %v575, 19
        %v580 = vpop.permute.xlu0 %579
        %581 = vrot.lane.b32.xlu0 %v576, 19
        %v582 = vpop.permute.xlu0 %581
        %vm583 = vcmask 154624
        %v584 = vsel %vm583, %v578, %v580
        %v585 = vsel %vm583, %v580, %v582
        %v589 = vmul.f32 %v565, %v578
        %v590 = vmul.f32 %v566, %v584
        %v591 = vmul.f32 %v567, %v585
        %v592 = vmul.f32 %v568, %v578
        %v593 = vmul.f32 %v569, %v584
        %v594 = vmul.f32 %v570, %v585
        %v595 = vpack.c.bf16 %v592, %v589
        %v596 = vpack.c.bf16 %v593, %v590
        %v597 = vpack.c.bf16 %v594, %v591
        %v601 = vrot.slane %v595, 2
        %v602 = vrot.slane %v596, 2
        %v603 = vrot.slane %v597, 2
        %v606 = vsel %vm583, 0, %v601
        %vm607 = vcmask 416768
        %v609 = vsel %vm607, %v603, 0
        %v612 = vrot.slane %v606, 4
        %v613 = vrot.slane %v602, 4
        %v614 = vrot.slane %v609, 4
        %615 = vrot.lane.b32.xlu0 %v612, 127
        %v616 = vpop.permute.xlu0 %615
        %617 = vrot.lane.b32.xlu0 %v613, 127
        %v618 = vpop.permute.xlu0 %617
        %619 = vrot.lane.b32.xlu0 %v614, 127
        %v620 = vpop.permute.xlu0 %619
        %v621 = vsel %vm223, %v616, %v618
        %v622 = vsel %vm223, %v618, %v620
        %623 = vrot.lane.b32.xlu0 %v606, 126
        %v624 = vpop.permute.xlu0 %623
        %625 = vrot.lane.b32.xlu0 %v602, 126
        %v626 = vpop.permute.xlu0 %625
        %627 = vrot.lane.b32.xlu0 %v609, 126
        %v628 = vpop.permute.xlu0 %627
        %v629 = vsel %vm244, %v624, %v626
        %v630 = vsel %vm244, %v626, %v628
        %631 = vrot.lane.b32.xlu0 %v612, 110
        %v632 = vpop.permute.xlu0 %631
        %633 = vrot.lane.b32.xlu0 %v613, 110
        %v634 = vpop.permute.xlu0 %633
        %635 = vrot.lane.b32.xlu0 %v614, 110
        %v636 = vpop.permute.xlu0 %635
        %v637 = vsel %vm258, %v632, %v634
        %v638 = vsel %vm258, %v634, %v636
        %639 = vrot.lane.b32.xlu0 %v606, 109
        %v640 = vpop.permute.xlu0 %639
        %641 = vrot.lane.b32.xlu0 %v602, 109
        %v642 = vpop.permute.xlu0 %641
        %643 = vrot.lane.b32.xlu0 %v609, 109
        %v644 = vpop.permute.xlu0 %643
        %v645 = vsel %vm267, %v640, %v642
        %v646 = vsel %vm267, %v642, %v644
        %647 = vrot.lane.b32.xlu0 %v612, 108
        %v648 = vpop.permute.xlu0 %647
        %649 = vrot.lane.b32.xlu0 %v613, 108
        %v650 = vpop.permute.xlu0 %649
        %651 = vrot.lane.b32.xlu0 %v614, 108
        %v652 = vpop.permute.xlu0 %651
        %v653 = vsel %vm276, %v648, %v650
        %v654 = vsel %vm276, %v650, %v652
        %655 = vrot.lane.b32.xlu0 %v606, 92
        %v656 = vpop.permute.xlu0 %655
        %657 = vrot.lane.b32.xlu0 %v602, 92
        %v658 = vpop.permute.xlu0 %657
        %659 = vrot.lane.b32.xlu0 %v609, 92
        %v660 = vpop.permute.xlu0 %659
        %v661 = vsel %vm291, %v656, %v658
        %v662 = vsel %vm291, %v658, %v660
        %663 = vrot.lane.b32.xlu0 %v612, 91
        %v664 = vpop.permute.xlu0 %663
        %665 = vrot.lane.b32.xlu0 %v613, 91
        %v666 = vpop.permute.xlu0 %665
        %667 = vrot.lane.b32.xlu0 %v614, 91
        %v668 = vpop.permute.xlu0 %667
        %v669 = vsel %vm302, %v664, %v666
        %v670 = vsel %vm302, %v666, %v668
        %671 = vrot.lane.b32.xlu0 %v606, 90
        %v672 = vpop.permute.xlu0 %671
        %673 = vrot.lane.b32.xlu0 %v602, 90
        %v674 = vpop.permute.xlu0 %673
        %675 = vrot.lane.b32.xlu0 %v609, 90
        %v676 = vpop.permute.xlu0 %675
        %v677 = vsel %vm311, %v672, %v674
        %v678 = vsel %vm311, %v674, %v676
        %v680 = vsel %vm327, %v606, %v621
        %v684 = vsel %vm327, %v602, %v622
        %v687 = vsel %vm327, %v609, %v620
        %v691 = vsel %vm327, %v629, %v637
        %v695 = vsel %vm327, %v630, %v638
        %v699 = vsel %vm327, %v628, %v636
        %v703 = vsel %vm327, %v645, %v653
        %v707 = vsel %vm327, %v646, %v654
        %v711 = vsel %vm327, %v644, %v652
        %v715 = vsel %vm327, %v661, %v669
        %v719 = vsel %vm327, %v662, %v670
        %v723 = vsel %vm327, %v660, %v668
        %v725 = vld [vmem:[%s2] sm:$0xf]
        %vm726 = vcmask 588800
        %v728 = vsel %vm726, %v725, 0
        %v731 = vsel %vm327, %v677, 0
        %v734 = vsel %vm327, %v678, 0
        %v737 = vsel %vm327, %v676, 0
        %739 = vmatprep.subr.bf16.mxu0 0
        %740 = vmatpush1.bf16.msra.mxu0 0
        %741 = vmatprep.subr.bf16.mxu0 0
        %742 = vmatpush1.bf16.msra.mxu0 0
        %743 = vmatprep.subr.bf16.mxu0 0
        %744 = vmatpush1.bf16.msra.mxu0 0
        %745 = vmatprep.subr.bf16.mxu0 %v734
        %746 = vmatpush1.bf16.msra.mxu0 %v731
        %747 = vmatprep.subr.bf16.mxu0 %v719
        %748 = vmatpush1.bf16.msra.mxu0 %v715
        %749 = vmatprep.subr.bf16.mxu0 %v707
        %750 = vmatpush1.bf16.msra.mxu0 %v703
        %751 = vmatprep.subr.bf16.mxu0 %v695
        %752 = vmatpush1.bf16.msra.mxu0 %v691
        %753 = vmatprep.subr.bf16.mxu0 %v684
        %754 = vmatpush1.bf16.msra.mxu0 %v680
        %755 = vmatprep.subr.bf16.mxu0 0
        %756 = vmatpush2.bf16.msra.mxu0 0
        %757 = vmatprep.subr.bf16.mxu0 0
        %758 = vmatpush2.bf16.msra.mxu0 0
        %759 = vmatprep.subr.bf16.mxu0 0
        %760 = vmatpush2.bf16.msra.mxu0 0
        %761 = vmatprep.subr.bf16.mxu0 0
        %762 = vmatpush2.bf16.msra.mxu0 0
        %763 = vmatprep.subr.bf16.mxu0 0
        %764 = vmatpush2.bf16.msra.mxu0 0
        %765 = vmatprep.subr.bf16.mxu0 0
        %766 = vmatpush2.bf16.msra.mxu0 0
        %767 = vmatprep.subr.bf16.mxu0 0
        %768 = vmatpush2.bf16.msra.mxu0 0
        %769 = vmatprep.subr.bf16.mxu0 0
        %770 = vmatpush2.bf16.msra.mxu0 0
        %771 = vmatprep.mubr.bf16.mxu0 0
        %772 = vmatmul.mubr.bf16.gmra.mxu0 %v728
        %v773 = vpop.f32.mrf.mxu0
        %v774 = vadd.f32 0.0, %v773
        %v775 = vpop.f32.mrf.mxu0
        %v776 = vadd.f32 0.0, %v775
        %v777 = vpop.f32.mrf.mxu0
        %v778 = vpop.f32.mrf.mxu0
        %779 = vdwg.mxu0
        %780 = vmatprep.subr.bf16.mxu0 0
        %781 = vmatpush1.bf16.msra.mxu0 0
        %782 = vmatprep.subr.bf16.mxu0 0
        %783 = vmatpush1.bf16.msra.mxu0 0
        %784 = vmatprep.subr.bf16.mxu0 0
        %785 = vmatpush1.bf16.msra.mxu0 0
        %786 = vmatprep.subr.bf16.mxu0 0
        %787 = vmatpush1.bf16.msra.mxu0 %v737
        %788 = vmatprep.subr.bf16.mxu0 0
        %789 = vmatpush1.bf16.msra.mxu0 %v723
        %790 = vmatprep.subr.bf16.mxu0 0
        %791 = vmatpush1.bf16.msra.mxu0 %v711
        %792 = vmatprep.subr.bf16.mxu0 0
        %793 = vmatpush1.bf16.msra.mxu0 %v699
        %794 = vmatprep.subr.bf16.mxu0 0
        %795 = vmatpush1.bf16.msra.mxu0 %v687
        %796 = vmatprep.subr.bf16.mxu0 0
        %797 = vmatpush2.bf16.msra.mxu0 0
        %798 = vmatprep.subr.bf16.mxu0 0
        %799 = vmatpush2.bf16.msra.mxu0 0
        %800 = vmatprep.subr.bf16.mxu0 0
        %801 = vmatpush2.bf16.msra.mxu0 0
        %802 = vmatprep.subr.bf16.mxu0 0
        %803 = vmatpush2.bf16.msra.mxu0 0
        %804 = vmatprep.subr.bf16.mxu0 0
        %805 = vmatpush2.bf16.msra.mxu0 0
        %806 = vmatprep.subr.bf16.mxu0 0
        %807 = vmatpush2.bf16.msra.mxu0 0
        %808 = vmatprep.subr.bf16.mxu0 0
        %809 = vmatpush2.bf16.msra.mxu0 0
        %810 = vmatprep.subr.bf16.mxu0 0
        %811 = vmatpush2.bf16.msra.mxu0 0
        %812 = vmatprep.mubr.bf16.mxu0 0
        %813 = vmatmul.mubr.bf16.gmra.mxu0 %v728
        %v814 = vpop.f32.mrf.mxu0
        %v815 = vadd.f32 0.0, %v814
        %v816 = vpop.f32.mrf.mxu0
        %v817 = vpop.f32.mrf.mxu0
        %v818 = vpop.f32.mrf.mxu0
        %819 = vdwg.mxu0
        %v820 = vadd.f32 %v473, %v774
        %v821 = vadd.f32 %v475, %v776
        %v822 = vadd.f32 %v522, %v815
        %v823 = vtanh.pop %v820
        %v824 = vtanh.pop %v821
        %v825 = vtanh.pop %v822
        %v826 = vsub.f32 1.0, %v540
        %v827 = vsub.f32 1.0, %v542
        %v828 = vsub.f32 1.0, %v544
        %v832 = vrot.slane %v826, 4
        %v833 = vrot.slane %v827, 4
        %v834 = vrot.slane %v828, 4
        %835 = vrot.lane.b32.xlu0 %v832, 19
        %v836 = vpop.permute.xlu0 %835
        %837 = vrot.lane.b32.xlu0 %v833, 19
        %v838 = vpop.permute.xlu0 %837
        %839 = vrot.lane.b32.xlu0 %v834, 19
        %v840 = vpop.permute.xlu0 %839
        %v841 = vsel %vm583, %v836, %v838
        %v842 = vsel %vm583, %v838, %v840
        %v846 = vmul.f32 %v565, %v836
        %v847 = vmul.f32 %v566, %v841
        %v848 = vmul.f32 %v567, %v842
        %v849 = vmul.f32 %v568, %v836
        %v850 = vmul.f32 %v569, %v841
        %v851 = vmul.f32 %v570, %v842
        %v852 = vmul.f32 %v823, %v540
        %v853 = vmul.f32 %v824, %v542
        %v854 = vmul.f32 %v825, %v544
        %v858 = vrot.slane %v852, 4
        %v859 = vrot.slane %v853, 4
        %v860 = vrot.slane %v854, 4
        %861 = vrot.lane.b32.xlu0 %v858, 19
        %v862 = vpop.permute.xlu0 %861
        %863 = vrot.lane.b32.xlu0 %v859, 19
        %v864 = vpop.permute.xlu0 %863
        %865 = vrot.lane.b32.xlu0 %v860, 19
        %v866 = vpop.permute.xlu0 %865
        %v867 = vsel %vm583, %v862, %v864
        %v868 = vsel %vm583, %v864, %v866
        %v872 = vadd.f32 %v846, %v862
        %v873 = vadd.f32 %v847, %v867
        %v874 = vadd.f32 %v848, %v868
        %v875 = vadd.f32 %v849, %v862
        %v876 = vadd.f32 %v850, %v867
        %v877 = vadd.f32 %v851, %v868
        %v884 = vrot.slane %v872, 4
        %v885 = vrot.slane %v875, 4
        %v886 = vsel %vm327, %v884, %v885
        %v887 = vrot.slane %v873, 4
        %v888 = vrot.slane %v876, 4
        %v889 = vsel %vm327, %v887, %v888
        %v890 = vrot.slane %v874, 4
        %v891 = vrot.slane %v877, 4
        %v892 = vsel %vm327, %v890, %v891
        %893 = vrot.lane.b32.xlu0 %v886, 109
        %v894 = vpop.permute.xlu0 %893
        %895 = vrot.lane.b32.xlu0 %v889, 109
        %v896 = vpop.permute.xlu0 %895
        %897 = vrot.lane.b32.xlu0 %v892, 109
        %v898 = vpop.permute.xlu0 %897
        %vm899 = vcmask 891904
        %v900 = vsel %vm899, %v894, %v896
        %v901 = vsel %vm899, %v896, %v898
        %905 = vst [vmem:[%s190] sm:$0xff] %v900
        %906 = vst [vmem:[%s190 + $0x8] sm:$0xff] %v901
        %vm907 = vcmask 261120
        %908 = vst.msk [vmem:[%s190 + $0x10] sm:$0xff] %vm907, %v898
        %s909 = sand.u32 %s115, 1
        %s910 = scalar_lea.sflag [#allocation3], %s909
        %s911 = sand.u32 %s115, 1
        %s912 = smul.addr %s911, 24
        %s913 = scalar_lea.vmem [#allocation2], %s912
        // Predicated region
        $region37: #{tpu_custom_call.1} parent=35 // pred_check
          %p914 = pneg %p125
        $region38: #{tpu_custom_call.1} parent=35 // pred_check_branch
          %916 = sbr.rel (%p914) target = $region40
        $region39: #{tpu_custom_call.1} parent=35 // pred_region
          %s918 = ssub.s32 384, 384
          %919 = vsyncadd %s910, %s918
          %s920 = smul.addr %s18, 3
          %s921 = smul.addr %s920, 128
          %s922 = scalar_lea.hbm %s4, %s921
          %s924 = sshll.u32 %s913, 4
          %s925 = int_to_ptr.vmem [resolvable:$true] %s924
          %927 = dma.vmem_to_hbm [thread:$0]  %s925, 384, %s922, %s910
        $region40: #{tpu_custom_call.1} parent=35 // pred_fallthru
          _
      $region36: #{tpu_custom_call.1} parent=5 // pred_fallthru
        _
      %p928 = scmp.le.s32.totalorder 2, %s13
      // Predicated region
      $region41: #{tpu_custom_call.1} parent=5 // pred_check
        %p929 = pneg %p928
      $region42: #{tpu_custom_call.1} parent=5 // pred_check_branch
        %931 = sbr.rel (%p929) target = $region44
      $region43: #{tpu_custom_call.1} parent=5 // pred_region
        %s932 = ssub.s32 %s13, 2
        // Predicated region
        $region45: #{tpu_custom_call.1} parent=43 // pred_check
          %p933 = pneg %p131
        $region46: #{tpu_custom_call.1} parent=43 // pred_check_branch
          %935 = sbr.rel (%p933) target = $region48
        $region47: #{tpu_custom_call.1} parent=43 // pred_region
          %s936 = sand.u32 %s116, 1
          %s937 = scalar_lea.sflag [#allocation3], %s936
          %s938 = sand.u32 %s116, 1
          %s939 = smul.addr %s938, 24
          %s940 = scalar_lea.vmem [#allocation2], %s939
          %941 = dma.done %s937, 384
        $region48: #{tpu_custom_call.1} parent=43 // pred_fallthru
          _
      $region44: #{tpu_custom_call.1} parent=5 // pred_fallthru
        _
    $region6: #{tpu_custom_call.1} parent=1 // loop_footer
      %s17 = sadd.s32 1, %s13
    $region7: #{tpu_custom_call.1} parent=1 // loop_footer_branch
      %12 = sbr.rel target = $region3
    $region8: #{tpu_custom_call.1} parent=1 // loop_exit
      _
    %942 = vsyncpa [#allocation3], 1
    %s943 = scalar_lea.sflag [#allocation3], 1
    %944 = vsyncpa %s943, 1

</llo_original>
